<compile_context>
chip_gen: v5e
topology: v5e:2x2
jax: 0.10.0
libtpu: 0.0.40
codegen_flags: <defaults>
</compile_context>

<pallas_src>
import math

import jax
import jax.numpy as jnp
from jax.experimental import pallas as pl
from jax.experimental.pallas import tpu as pltpu


def _attention_kernel(q_ref, k_ref, v_ref, mask_ref, o_ref):
    # q_ref/k_ref/v_ref/o_ref: (1, H, S, D); mask_ref: (1, S, S)
    _, H, S, D = q_ref.shape
    scale = 1.0 / math.sqrt(D)

    q = q_ref[0].astype(jnp.float32) * scale          # (H, S, D), scale folded in
    k = k_ref[0].astype(jnp.float32)                  # (H, S, D)
    v = v_ref[0].astype(jnp.float32)                  # (H, S, D)
    m = mask_ref[0].astype(jnp.float32)               # (S, S), shared by all heads

    # qk[h, i, j] = sum_d q[h, i, d] * k[h, j, d]  — contraction on D for both
    # operands (native transposed-RHS MXU matmul, no in-kernel K transpose).
    qk = jnp.einsum("hqd,hkd->hqk", q, k,
                    preferred_element_type=jnp.float32)           # (H, S, S)
    qk = qk + m[None, :, :]

    # Numerically stable softmax along the key axis, all heads at once.
    qk_max = jnp.max(qk, axis=-1, keepdims=True)
    p = jnp.exp(qk - qk_max)                                      # (H, S, S)
    denom = jnp.sum(p, axis=-1, keepdims=True)                    # (H, S, 1)

    # EUP approximate reciprocal + one Newton-Raphson step on the tiny (H,S,1)
    # tensor (~f32 accuracy).  Independent of the PV matmul below, so it
    # issues concurrently on the EUP/VPU while the MXU is busy.
    inv = pl.reciprocal(denom, approx=True)
    inv = inv * (2.0 - denom * inv)

    # Unnormalized PV matmul first, then scale the (H, S, D) result — cheaper
    # than normalizing the (H, S, S) probabilities and breaks the dependence
    # between the reciprocal and the matmul.
    out = jnp.einsum("hqk,hkd->hqd", p, v,
                     preferred_element_type=jnp.float32)          # (H, S, D)
    o_ref[0] = (out * inv).astype(o_ref.dtype)


@jax.jit
def sdpa_pallas(Q4, K, V6, mask):
    """Q4, K, V6: [B, H, S, D] float32; mask: [B, S, S] float32 (broadcast over H)."""
    B, H, S, D = Q4.shape
    assert K.shape == (B, H, S, D) and V6.shape == (B, H, S, D)
    assert mask.shape == (B, S, S)

    qkv_spec = pl.BlockSpec((1, H, S, D), lambda b: (b, 0, 0, 0))
    mask_spec = pl.BlockSpec((1, S, S), lambda b: (b, 0, 0))
    out_spec = pl.BlockSpec((1, H, S, D), lambda b: (b, 0, 0, 0))

    return pl.pallas_call(
        _attention_kernel,
        out_shape=jax.ShapeDtypeStruct((B, H, S, D), Q4.dtype),
        grid_spec=pltpu.PrefetchScalarGridSpec(
            num_scalar_prefetch=0,
            grid=(B,),
            in_specs=[qkv_spec, qkv_spec, qkv_spec, mask_spec],
            out_specs=out_spec,
        ),
        compiler_params=pltpu.CompilerParams(
            dimension_semantics=("parallel",),
        ),
    )(Q4, K, V6, mask)


def sdpa_reference(Q4, K, V6, mask):
    d = Q4.shape[-1]
    qk = jnp.einsum("bhqd,bhkd->bhqk", Q4, K) / math.sqrt(d)
    qk = qk + mask[:, None, :, :]
    attn = jax.nn.softmax(qk, axis=-1)
    return jnp.einsum("bhqk,bhkd->bhqd", attn, V6)


if __name__ == "__main__":
    # Small shapes consistent with the module's [B, H, S, D] attention pattern
    # (S=56 matching the spec's 56x56 mask; H*D = 128 = one lane width).
    B, H, S, D = 2, 4, 56, 32

    key = jax.random.PRNGKey(0)
    kq, kk, kv, km = jax.random.split(key, 4)

    Q4 = jax.random.normal(kq, (B, H, S, D), dtype=jnp.float32)
    K = jax.random.normal(kk, (B, H, S, D), dtype=jnp.float32)
    V6 = jax.random.normal(kv, (B, H, S, D), dtype=jnp.float32)
    # Additive mask: -1e9 where "masked", 0 otherwise (broadcasts over heads).
    mask = jnp.where(
        jax.random.uniform(km, (B, S, S)) > 0.7,
        jnp.float32(-1e9),
        jnp.float32(0.0),
    )

    out = sdpa_pallas(Q4, K, V6, mask)
    out = jax.block_until_ready(out)

    ref = sdpa_reference(Q4, K, V6, mask)
    assert out.shape == (B, H, S, D)
    # The Newton-refined reciprocal is ~f32-accurate; the tolerance mainly
    # budgets for MXU-vs-XLA matmul rounding differences between the kernel
    # and the reference einsums.
    assert jnp.allclose(out, ref, atol=1e-3, rtol=1e-3)

    print("KERNEL_OK")
</pallas_src>

<mosaic_0001>
module attributes {stable_mosaic.version = 11 : i64} {
  func.func @_attention_kernel(%arg0: i32, %arg1: memref<1x4x56x32xf32, #tpu.memory_space<vmem>>, %arg2: memref<1x4x56x32xf32, #tpu.memory_space<vmem>>, %arg3: memref<1x4x56x32xf32, #tpu.memory_space<vmem>>, %arg4: memref<1x56x56xf32, #tpu.memory_space<vmem>>, %arg5: memref<1x4x56x32xf32, #tpu.memory_space<vmem>>) attributes {dimension_semantics = [#tpu.dimension_semantics<parallel>], iteration_bounds = array<i64: 2>, scalar_prefetch = 0 : i64, scratch_operands = 0 : i64, tpu.core_type = #tpu.core_type<tc>, window_params = [{transform_indices = @transform_0, window_bounds = array<i64: 1, 4, 56, 32>}, {transform_indices = @transform_1, window_bounds = array<i64: 1, 4, 56, 32>}, {transform_indices = @transform_2, window_bounds = array<i64: 1, 4, 56, 32>}, {transform_indices = @transform_3, window_bounds = array<i64: 1, 56, 56>}, {transform_indices = @transform_4, window_bounds = array<i64: 1, 4, 56, 32>}]} {
    %c0 = arith.constant 0 : index
    %c0_0 = arith.constant 0 : index
    %c0_1 = arith.constant 0 : index
    %c0_2 = arith.constant 0 : index
    %0 = vector.load %arg1[%c0, %c0_0, %c0_1, %c0_2] : memref<1x4x56x32xf32, #tpu.memory_space<vmem>>, vector<1x4x56x32xf32>
    %1 = vector.shape_cast %0 : vector<1x4x56x32xf32> to vector<4x56x32xf32>
    %cst = arith.constant 0.176776692 : f32
    %2 = vector.broadcast %cst : f32 to vector<4x56x32xf32>
    %3 = arith.mulf %1, %2 : vector<4x56x32xf32>
    %c0_3 = arith.constant 0 : index
    %c0_4 = arith.constant 0 : index
    %c0_5 = arith.constant 0 : index
    %c0_6 = arith.constant 0 : index
    %4 = vector.load %arg2[%c0_3, %c0_4, %c0_5, %c0_6] : memref<1x4x56x32xf32, #tpu.memory_space<vmem>>, vector<1x4x56x32xf32>
    %5 = vector.shape_cast %4 : vector<1x4x56x32xf32> to vector<4x56x32xf32>
    %c0_7 = arith.constant 0 : index
    %c0_8 = arith.constant 0 : index
    %c0_9 = arith.constant 0 : index
    %c0_10 = arith.constant 0 : index
    %6 = vector.load %arg3[%c0_7, %c0_8, %c0_9, %c0_10] : memref<1x4x56x32xf32, #tpu.memory_space<vmem>>, vector<1x4x56x32xf32>
    %7 = vector.shape_cast %6 : vector<1x4x56x32xf32> to vector<4x56x32xf32>
    %c0_11 = arith.constant 0 : index
    %c0_12 = arith.constant 0 : index
    %c0_13 = arith.constant 0 : index
    %8 = vector.load %arg4[%c0_11, %c0_12, %c0_13] : memref<1x56x56xf32, #tpu.memory_space<vmem>>, vector<1x56x56xf32>
    %9 = vector.shape_cast %8 : vector<1x56x56xf32> to vector<56x56xf32>
    "tpu.trace_start"() <{level = 10 : i32, message = "hqd,hkd->hqk"}> : () -> ()
    %cst_14 = arith.constant dense<0.000000e+00> : vector<4x56x56xf32>
    %10 = tpu.matmul %3, %5, %cst_14 {dimension_numbers = #tpu.dot_dimension_numbers<[2], [2], [1], [1], [0, 0, 0, 1, 1, 1], [0], [0]>} : vector<4x56x32xf32>, vector<4x56x32xf32>, vector<4x56x56xf32> -> vector<4x56x56xf32>
    "tpu.trace_stop"() : () -> ()
    %11 = vector.shape_cast %9 : vector<56x56xf32> to vector<1x56x56xf32>
    %12 = vector.broadcast %11 : vector<1x56x56xf32> to vector<4x56x56xf32>
    %13 = arith.addf %10, %12 : vector<4x56x56xf32>
    %cst_15 = arith.constant dense<0xFF800000> : vector<4x56xf32>
    %14 = vector.multi_reduction <maximumf>, %13, %cst_15 [2] : vector<4x56x56xf32> to vector<4x56xf32>
    %15 = vector.shape_cast %14 : vector<4x56xf32> to vector<4x56x1xf32>
    %16 = vector.broadcast %15 : vector<4x56x1xf32> to vector<4x56x56xf32>
    %17 = arith.subf %13, %16 : vector<4x56x56xf32>
    %18 = math.exp %17 : vector<4x56x56xf32>
    %cst_16 = arith.constant dense<0.000000e+00> : vector<4x56xf32>
    %19 = vector.multi_reduction <add>, %18, %cst_16 [2] : vector<4x56x56xf32> to vector<4x56xf32>
    %20 = vector.shape_cast %19 : vector<4x56xf32> to vector<4x56x1xf32>
    %21 = tpu.reciprocal %20 {approx = true} : vector<4x56x1xf32> -> vector<4x56x1xf32>
    %22 = arith.mulf %20, %21 : vector<4x56x1xf32>
    %cst_17 = arith.constant 2.000000e+00 : f32
    %23 = vector.broadcast %cst_17 : f32 to vector<4x56x1xf32>
    %24 = arith.subf %23, %22 : vector<4x56x1xf32>
    %25 = arith.mulf %21, %24 : vector<4x56x1xf32>
    "tpu.trace_start"() <{level = 10 : i32, message = "hqk,hkd->hqd"}> : () -> ()
    %cst_18 = arith.constant dense<0.000000e+00> : vector<4x56x32xf32>
    %26 = tpu.matmul %18, %7, %cst_18 {dimension_numbers = #tpu.dot_dimension_numbers<[2], [1], [1], [2], [0, 0, 0, 1, 1, 2], [0], [0]>} : vector<4x56x56xf32>, vector<4x56x32xf32>, vector<4x56x32xf32> -> vector<4x56x32xf32>
    "tpu.trace_stop"() : () -> ()
    %27 = vector.broadcast %25 : vector<4x56x1xf32> to vector<4x56x32xf32>
    %28 = arith.mulf %26, %27 : vector<4x56x32xf32>
    %c0_19 = arith.constant 0 : index
    %c0_20 = arith.constant 0 : index
    %c0_21 = arith.constant 0 : index
    %c0_22 = arith.constant 0 : index
    %29 = vector.load %arg5[%c0_19, %c0_20, %c0_21, %c0_22] : memref<1x4x56x32xf32, #tpu.memory_space<vmem>>, vector<1x4x56x32xf32>
    %30 = vector.shape_cast %29 : vector<1x4x56x32xf32> to vector<4x56x32xf32>
    %31 = vector.shape_cast %28 : vector<4x56x32xf32> to vector<1x4x56x32xf32>
    tpu.vector_store %arg5[%c0_19, %c0_20, %c0_21, %c0_22], %31 {strides = array<i32>} : memref<1x4x56x32xf32, #tpu.memory_space<vmem>>, vector<1x4x56x32xf32>,
    return
  }
  func.func @transform_0(%arg0: i32) -> (i32, i32, i32, i32) {
    %c0_i32 = arith.constant 0 : i32
    %c0_i32_0 = arith.constant 0 : i32
    %c0_i32_1 = arith.constant 0 : i32
    %c0_i32_2 = arith.constant 0 : i32
    return %arg0, %c0_i32, %c0_i32_0, %c0_i32_1 : i32, i32, i32, i32
  }
  func.func @transform_1(%arg0: i32) -> (i32, i32, i32, i32) {
    %c0_i32 = arith.constant 0 : i32
    %c0_i32_0 = arith.constant 0 : i32
    %c0_i32_1 = arith.constant 0 : i32
    %c0_i32_2 = arith.constant 0 : i32
    return %arg0, %c0_i32, %c0_i32_0, %c0_i32_1 : i32, i32, i32, i32
  }
  func.func @transform_2(%arg0: i32) -> (i32, i32, i32, i32) {
    %c0_i32 = arith.constant 0 : i32
    %c0_i32_0 = arith.constant 0 : i32
    %c0_i32_1 = arith.constant 0 : i32
    %c0_i32_2 = arith.constant 0 : i32
    return %arg0, %c0_i32, %c0_i32_0, %c0_i32_1 : i32, i32, i32, i32
  }
  func.func @transform_3(%arg0: i32) -> (i32, i32, i32) {
    %c0_i32 = arith.constant 0 : i32
    %c0_i32_0 = arith.constant 0 : i32
    %c0_i32_1 = arith.constant 0 : i32
    return %arg0, %c0_i32, %c0_i32_0 : i32, i32, i32
  }
  func.func @transform_4(%arg0: i32) -> (i32, i32, i32, i32) {
    %c0_i32 = arith.constant 0 : i32
    %c0_i32_0 = arith.constant 0 : i32
    %c0_i32_1 = arith.constant 0 : i32
    %c0_i32_2 = arith.constant 0 : i32
    return %arg0, %c0_i32, %c0_i32_0, %c0_i32_1 : i32, i32, i32, i32
  }
}

</mosaic_0001>

<llo_original>
// kernel: sdpa_pallas.1
$region0: #{sdpa_pallas.1}
  #allocation0 [shape = 'u32[]', space=smem, size = 0x4, offset = 0x4, fixed_abs, tag = 'smem constant byte address 0x4 - core index']
  #allocation1 [shape = 'u32[72,128]{1,0:T(1,128)}', space=vmem, size = 0x9000, scoped, tag = 'internal scratch']
  %s0 = inlined_call_operand.vmem [shape: f32[2,4,56,32], index: 0, kind: input, shape index: {}]
  %s1 = inlined_call_operand.vmem [shape: f32[2,4,56,32], index: 1, kind: input, shape index: {}]
  %s2 = inlined_call_operand.vmem [shape: f32[2,4,56,32], index: 2, kind: input, shape index: {}]
  %s3 = inlined_call_operand.vmem [shape: f32[2,56,56], index: 3, kind: input, shape index: {}]
  %s4 = inlined_call_operand.vmem [shape: f32[2,4,56,32], index: 4, kind: output, shape index: {}]
  %s5 = sld [smem:[#allocation0]]
  $region49: #{sdpa_pallas.1} parent=0
    _
  %s7 = ssub.s32 1, %s5
  %s8 = scalar_select 0, %s7, %s5
  loop: start=0, step=1, limit=4
  $region2: #{sdpa_pallas.1} parent=0 // loop_pre_header
    _
  $region3: #{sdpa_pallas.1} parent=0 // loop_header
    %s10 = sphi 0, %s14
    %p11 = scmp.ge.s32.totalorder %s10, 4
    %s20 = sphi 0, %s22
    %s23 = sphi 0, %s20
    %s24 = sphi 0, %s23
    %s40 = sphi 0, %s24
    %s46 = sphi 0, %s48
    %s49 = sphi 0, %s46
    %s50 = sphi 0, %s49
    %s66 = sphi 0, %s50
    %s72 = sphi 0, %s74
    %s75 = sphi 0, %s72
    %s76 = sphi 0, %s75
    %s92 = sphi 0, %s76
    %s98 = sphi 0, %s100
    %s101 = sphi 0, %s98
    %s102 = sphi 0, %s101
    %s118 = sphi 0, %s102
    %s124 = sphi 0, %s126
    %s127 = sphi 0, %s124
    %s128 = sphi 0, %s127
    %s144 = sphi 0, %s128
  $region4: #{sdpa_pallas.1} parent=0 // loop_header_branch
    %13 = sbr.rel (%p11) target = $region8
  $region5: #{sdpa_pallas.1} parent=0 // loop_body
    %s15 = ssub.s32 %s10, 1
    %s16 = ssub.s32 %s10, 2
    %s17 = sadd.s32 %s10, 1
    %s18 = ssub.s32 %s10, %s17
    %p19 = scmp.eq.s32.totalorder %s18, 0
    %s21 = sadd.s32 %s20, 1
    %s22 = scalar_select %p19, %s20, %s21
    %p25 = pneg %p19
    %p26 = scmp.eq.s32.totalorder %s10, 1
    %p27 = por %p25, %p26
    %p28 = scmp.ne.s32.totalorder %s20, %s23
    %p29 = scmp.eq.s32.totalorder %s10, 0
    %p30 = por %p28, %p29
    %p31 = scmp.ne.s32.totalorder %s20, %s23
    %p32 = scmp.eq.s32.totalorder %s15, 1
    %p33 = por %p31, %p32
    %p34 = scmp.ne.s32.totalorder %s23, %s24
    %p35 = scmp.eq.s32.totalorder %s15, 0
    %p36 = por %p34, %p35
    %p37 = scmp.ne.s32.totalorder %s23, %s24
    %p38 = scmp.eq.s32.totalorder %s16, 1
    %p39 = por %p37, %p38
    %p41 = scmp.ne.s32.totalorder %s24, %s40
    %p42 = scmp.eq.s32.totalorder %s16, 0
    %p43 = por %p41, %p42
    %s44 = ssub.s32 %s10, %s17
    %p45 = scmp.eq.s32.totalorder %s44, 0
    %s47 = sadd.s32 %s46, 1
    %s48 = scalar_select %p45, %s46, %s47
    %p51 = pneg %p45
    %p52 = scmp.eq.s32.totalorder %s10, 1
    %p53 = por %p51, %p52
    %p54 = scmp.ne.s32.totalorder %s46, %s49
    %p55 = scmp.eq.s32.totalorder %s10, 0
    %p56 = por %p54, %p55
    %p57 = scmp.ne.s32.totalorder %s46, %s49
    %p58 = scmp.eq.s32.totalorder %s15, 1
    %p59 = por %p57, %p58
    %p60 = scmp.ne.s32.totalorder %s49, %s50
    %p61 = scmp.eq.s32.totalorder %s15, 0
    %p62 = por %p60, %p61
    %p63 = scmp.ne.s32.totalorder %s49, %s50
    %p64 = scmp.eq.s32.totalorder %s16, 1
    %p65 = por %p63, %p64
    %p67 = scmp.ne.s32.totalorder %s50, %s66
    %p68 = scmp.eq.s32.totalorder %s16, 0
    %p69 = por %p67, %p68
    %s70 = ssub.s32 %s10, %s17
    %p71 = scmp.eq.s32.totalorder %s70, 0
    %s73 = sadd.s32 %s72, 1
    %s74 = scalar_select %p71, %s72, %s73
    %p77 = pneg %p71
    %p78 = scmp.eq.s32.totalorder %s10, 1
    %p79 = por %p77, %p78
    %p80 = scmp.ne.s32.totalorder %s72, %s75
    %p81 = scmp.eq.s32.totalorder %s10, 0
    %p82 = por %p80, %p81
    %p83 = scmp.ne.s32.totalorder %s72, %s75
    %p84 = scmp.eq.s32.totalorder %s15, 1
    %p85 = por %p83, %p84
    %p86 = scmp.ne.s32.totalorder %s75, %s76
    %p87 = scmp.eq.s32.totalorder %s15, 0
    %p88 = por %p86, %p87
    %p89 = scmp.ne.s32.totalorder %s75, %s76
    %p90 = scmp.eq.s32.totalorder %s16, 1
    %p91 = por %p89, %p90
    %p93 = scmp.ne.s32.totalorder %s76, %s92
    %p94 = scmp.eq.s32.totalorder %s16, 0
    %p95 = por %p93, %p94
    %s96 = ssub.s32 %s10, %s17
    %p97 = scmp.eq.s32.totalorder %s96, 0
    %s99 = sadd.s32 %s98, 1
    %s100 = scalar_select %p97, %s98, %s99
    %p103 = pneg %p97
    %p104 = scmp.eq.s32.totalorder %s10, 1
    %p105 = por %p103, %p104
    %p106 = scmp.ne.s32.totalorder %s98, %s101
    %p107 = scmp.eq.s32.totalorder %s10, 0
    %p108 = por %p106, %p107
    %p109 = scmp.ne.s32.totalorder %s98, %s101
    %p110 = scmp.eq.s32.totalorder %s15, 1
    %p111 = por %p109, %p110
    %p112 = scmp.ne.s32.totalorder %s101, %s102
    %p113 = scmp.eq.s32.totalorder %s15, 0
    %p114 = por %p112, %p113
    %p115 = scmp.ne.s32.totalorder %s101, %s102
    %p116 = scmp.eq.s32.totalorder %s16, 1
    %p117 = por %p115, %p116
    %p119 = scmp.ne.s32.totalorder %s102, %s118
    %p120 = scmp.eq.s32.totalorder %s16, 0
    %p121 = por %p119, %p120
    %s122 = ssub.s32 %s10, %s17
    %p123 = scmp.eq.s32.totalorder %s122, 0
    %s125 = sadd.s32 %s124, 1
    %s126 = scalar_select %p123, %s124, %s125
    %p129 = pneg %p123
    %p130 = scmp.eq.s32.totalorder %s10, 1
    %p131 = por %p129, %p130
    %p132 = scmp.ne.s32.totalorder %s124, %s127
    %p133 = scmp.eq.s32.totalorder %s10, 0
    %p134 = por %p132, %p133
    %p135 = scmp.ne.s32.totalorder %s124, %s127
    %p136 = scmp.eq.s32.totalorder %s15, 1
    %p137 = por %p135, %p136
    %p138 = scmp.ne.s32.totalorder %s127, %s128
    %p139 = scmp.eq.s32.totalorder %s15, 0
    %p140 = por %p138, %p139
    %p141 = scmp.ne.s32.totalorder %s127, %s128
    %p142 = scmp.eq.s32.totalorder %s16, 1
    %p143 = por %p141, %p142
    %p145 = scmp.ne.s32.totalorder %s128, %s144
    %p146 = scmp.eq.s32.totalorder %s16, 0
    %p147 = por %p145, %p146
    %p148 = scmp.le.s32.totalorder 1, %s10
    %p149 = scmp.lt.s32.totalorder %s10, 3
    %p150 = pnand %p148, %p149
    %p151 = pneg %p150
    // Predicated region
    $region9: #{sdpa_pallas.1} parent=5 // pred_check
      _
    $region10: #{sdpa_pallas.1} parent=5 // pred_check_branch
      %153 = sbr.rel (%p150) target = $region12
    $region11: #{sdpa_pallas.1} parent=5 // pred_region
      %s154 = ssub.s32 %s10, 1
    $region12: #{sdpa_pallas.1} parent=5 // pred_fallthru
      _
    %p155 = scmp.lt.s32.totalorder %s10, 2
    // Predicated region
    $region13: #{sdpa_pallas.1} parent=5 // pred_check
      %p156 = pneg %p155
    $region14: #{sdpa_pallas.1} parent=5 // pred_check_branch
      %158 = sbr.rel (%p156) target = $region16
    $region15: #{sdpa_pallas.1} parent=5 // pred_region
      // Predicated region
      $region17: #{sdpa_pallas.1} parent=15 // pred_check
        %p159 = pneg %p30
      $region18: #{sdpa_pallas.1} parent=15 // pred_check_branch
        %161 = sbr.rel (%p159) target = $region20
      $region19: #{sdpa_pallas.1} parent=15 // pred_region
        %p162 = scmp.lt.s32.totalorder %s10, 1
        %s163 = scalar_select %p162, %s10, 1
        %s164 = smul.addr %s163, 28
        %s165 = smul.addr %s164, 8
        %s166 = scalar_lea.vmem %s0, %s165
      $region20: #{sdpa_pallas.1} parent=15 // pred_fallthru
        _
      // Predicated region
      $region21: #{sdpa_pallas.1} parent=15 // pred_check
        %p167 = pneg %p56
      $region22: #{sdpa_pallas.1} parent=15 // pred_check_branch
        %169 = sbr.rel (%p167) target = $region24
      $region23: #{sdpa_pallas.1} parent=15 // pred_region
        %p170 = scmp.lt.s32.totalorder %s10, 1
        %s171 = scalar_select %p170, %s10, 1
        %s172 = smul.addr %s171, 28
        %s173 = smul.addr %s172, 8
        %s174 = scalar_lea.vmem %s1, %s173
      $region24: #{sdpa_pallas.1} parent=15 // pred_fallthru
        _
      // Predicated region
      $region25: #{sdpa_pallas.1} parent=15 // pred_check
        %p175 = pneg %p82
      $region26: #{sdpa_pallas.1} parent=15 // pred_check_branch
        %177 = sbr.rel (%p175) target = $region28
      $region27: #{sdpa_pallas.1} parent=15 // pred_region
        %p178 = scmp.lt.s32.totalorder %s10, 1
        %s179 = scalar_select %p178, %s10, 1
        %s180 = smul.addr %s179, 28
        %s181 = smul.addr %s180, 8
        %s182 = scalar_lea.vmem %s2, %s181
      $region28: #{sdpa_pallas.1} parent=15 // pred_fallthru
        _
      // Predicated region
      $region29: #{sdpa_pallas.1} parent=15 // pred_check
        %p183 = pneg %p108
      $region30: #{sdpa_pallas.1} parent=15 // pred_check_branch
        %185 = sbr.rel (%p183) target = $region32
      $region31: #{sdpa_pallas.1} parent=15 // pred_region
        %p186 = scmp.lt.s32.totalorder %s10, 1
        %s187 = scalar_select %p186, %s10, 1
        %s188 = smul.addr %s187, 7
        %s189 = smul.addr %s188, 8
        %s190 = scalar_lea.vmem %s3, %s189
      $region32: #{sdpa_pallas.1} parent=15 // pred_fallthru
        _
    $region16: #{sdpa_pallas.1} parent=5 // pred_fallthru
      _
    %p191 = scmp.le.s32.totalorder 1, %s10
    %p192 = scmp.lt.s32.totalorder %s10, 3
    %p193 = pnand %p191, %p192
    %p194 = pneg %p193
    // Predicated region
    $region33: #{sdpa_pallas.1} parent=5 // pred_check
      _
    $region34: #{sdpa_pallas.1} parent=5 // pred_check_branch
      %196 = sbr.rel (%p193) target = $region36
    $region35: #{sdpa_pallas.1} parent=5 // pred_region
      %s197 = ssub.s32 %s10, 1
      %p198 = scmp.lt.s32.totalorder %s15, 1
      %s199 = scalar_select %p198, %s15, 1
      %s200 = smul.addr %s199, 28
      %s201 = smul.addr %s200, 8
      %s202 = scalar_lea.vmem %s0, %s201
      %p203 = pneg %p36
      %p204 = pneg %p33
      %p205 = scmp.lt.s32.totalorder %s15, 1
      %s206 = scalar_select %p205, %s15, 1
      %s207 = smul.addr %s206, 28
      %s208 = smul.addr %s207, 8
      %s209 = scalar_lea.vmem %s1, %s208
      %p210 = pneg %p62
      %p211 = pneg %p59
      %p212 = scmp.lt.s32.totalorder %s15, 1
      %s213 = scalar_select %p212, %s15, 1
      %s214 = smul.addr %s213, 28
      %s215 = smul.addr %s214, 8
      %s216 = scalar_lea.vmem %s2, %s215
      %p217 = pneg %p88
      %p218 = pneg %p85
      %p219 = scmp.lt.s32.totalorder %s15, 1
      %s220 = scalar_select %p219, %s15, 1
      %s221 = smul.addr %s220, 7
      %s222 = smul.addr %s221, 8
      %s223 = scalar_lea.vmem %s3, %s222
      %p224 = pneg %p114
      %p225 = pneg %p111
      %p226 = pneg %p140
      %p227 = pneg %p137
      %p228 = scmp.lt.s32.totalorder %s15, 1
      %s229 = scalar_select %p228, %s15, 1
      %s230 = smul.addr %s229, 28
      %s231 = smul.addr %s230, 8
      %s232 = scalar_lea.vmem %s4, %s231
      %p233 = scmp.lt.s32.totalorder %s15, 1
      %s234 = scalar_select %p233, %s15, 1
      %s235 = smul.addr %s234, 28
      %s236 = smul.addr %s235, 8
      %s237 = scalar_lea.vmem %s0, %s236
      %p238 = scmp.lt.s32.totalorder %s15, 1
      %s239 = scalar_select %p238, %s15, 1
      %s240 = smul.addr %s239, 28
      %s241 = smul.addr %s240, 8
      %s242 = scalar_lea.vmem %s1, %s241
      %p243 = scmp.lt.s32.totalorder %s15, 1
      %s244 = scalar_select %p243, %s15, 1
      %s245 = smul.addr %s244, 28
      %s246 = smul.addr %s245, 8
      %s247 = scalar_lea.vmem %s2, %s246
      %p248 = scmp.lt.s32.totalorder %s15, 1
      %s249 = scalar_select %p248, %s15, 1
      %s250 = smul.addr %s249, 7
      %s251 = smul.addr %s250, 8
      %s252 = scalar_lea.vmem %s3, %s251
      %p253 = scmp.lt.s32.totalorder %s15, 1
      %s254 = scalar_select %p253, %s15, 1
      %s255 = smul.addr %s254, 28
      %s256 = smul.addr %s255, 8
      %s257 = scalar_lea.vmem %s4, %s256
      %v258 = vld [vmem:[%s237] sm:$0xff]
      %v259 = vld [vmem:[%s237 + $0x8] sm:$0xff]
      %v260 = vld [vmem:[%s237 + $0x10] sm:$0xff]
      %v261 = vld [vmem:[%s237 + $0x18] sm:$0xff]
      %v262 = vld [vmem:[%s237 + $0x20] sm:$0xff]
      %v263 = vld [vmem:[%s237 + $0x28] sm:$0xff]
      %v264 = vld [vmem:[%s237 + $0x30] sm:$0xff]
      %v265 = vld [vmem:[%s237 + $0x38] sm:$0xff]
      %v266 = vld [vmem:[%s237 + $0x40] sm:$0xff]
      %v267 = vld [vmem:[%s237 + $0x48] sm:$0xff]
      %v268 = vld [vmem:[%s237 + $0x50] sm:$0xff]
      %v269 = vld [vmem:[%s237 + $0x58] sm:$0xff]
      %v270 = vld [vmem:[%s237 + $0x60] sm:$0xff]
      %v271 = vld [vmem:[%s237 + $0x68] sm:$0xff]
      %v272 = vld [vmem:[%s237 + $0x70] sm:$0xff]
      %v273 = vld [vmem:[%s237 + $0x78] sm:$0xff]
      %v274 = vld [vmem:[%s237 + $0x80] sm:$0xff]
      %v275 = vld [vmem:[%s237 + $0x88] sm:$0xff]
      %v276 = vld [vmem:[%s237 + $0x90] sm:$0xff]
      %v277 = vld [vmem:[%s237 + $0x98] sm:$0xff]
      %v278 = vld [vmem:[%s237 + $0xa0] sm:$0xff]
      %v279 = vld [vmem:[%s237 + $0xa8] sm:$0xff]
      %v280 = vld [vmem:[%s237 + $0xb0] sm:$0xff]
      %v281 = vld [vmem:[%s237 + $0xb8] sm:$0xff]
      %v282 = vld [vmem:[%s237 + $0xc0] sm:$0xff]
      %v283 = vld [vmem:[%s237 + $0xc8] sm:$0xff]
      %v284 = vld [vmem:[%s237 + $0xd0] sm:$0xff]
      %v285 = vld [vmem:[%s237 + $0xd8] sm:$0xff]
      %v286 = vmul.f32 %v258, 0.17677669
      %v287 = vmul.f32 %v259, 0.17677669
      %v288 = vmul.f32 %v260, 0.17677669
      %v289 = vmul.f32 %v261, 0.17677669
      %v290 = vmul.f32 %v262, 0.17677669
      %v291 = vmul.f32 %v263, 0.17677669
      %v292 = vmul.f32 %v264, 0.17677669
      %v293 = vmul.f32 %v265, 0.17677669
      %v294 = vmul.f32 %v266, 0.17677669
      %v295 = vmul.f32 %v267, 0.17677669
      %v296 = vmul.f32 %v268, 0.17677669
      %v297 = vmul.f32 %v269, 0.17677669
      %v298 = vmul.f32 %v270, 0.17677669
      %v299 = vmul.f32 %v271, 0.17677669
      %v300 = vmul.f32 %v272, 0.17677669
      %v301 = vmul.f32 %v273, 0.17677669
      %v302 = vmul.f32 %v274, 0.17677669
      %v303 = vmul.f32 %v275, 0.17677669
      %v304 = vmul.f32 %v276, 0.17677669
      %v305 = vmul.f32 %v277, 0.17677669
      %v306 = vmul.f32 %v278, 0.17677669
      %v307 = vmul.f32 %v279, 0.17677669
      %v308 = vmul.f32 %v280, 0.17677669
      %v309 = vmul.f32 %v281, 0.17677669
      %v310 = vmul.f32 %v282, 0.17677669
      %v311 = vmul.f32 %v283, 0.17677669
      %v312 = vmul.f32 %v284, 0.17677669
      %v313 = vmul.f32 %v285, 0.17677669
      %v314 = vld [vmem:[%s242] sm:$0xff]
      %v315 = vld [vmem:[%s242 + $0x8] sm:$0xff]
      %v316 = vld [vmem:[%s242 + $0x10] sm:$0xff]
      %v317 = vld [vmem:[%s242 + $0x18] sm:$0xff]
      %v318 = vld [vmem:[%s242 + $0x20] sm:$0xff]
      %v319 = vld [vmem:[%s242 + $0x28] sm:$0xff]
      %v320 = vld [vmem:[%s242 + $0x30] sm:$0xff]
      %v321 = vld [vmem:[%s242 + $0x38] sm:$0xff]
      %v322 = vld [vmem:[%s242 + $0x40] sm:$0xff]
      %v323 = vld [vmem:[%s242 + $0x48] sm:$0xff]
      %v324 = vld [vmem:[%s242 + $0x50] sm:$0xff]
      %v325 = vld [vmem:[%s242 + $0x58] sm:$0xff]
      %v326 = vld [vmem:[%s242 + $0x60] sm:$0xff]
      %v327 = vld [vmem:[%s242 + $0x68] sm:$0xff]
      %v328 = vld [vmem:[%s242 + $0x70] sm:$0xff]
      %v329 = vld [vmem:[%s242 + $0x78] sm:$0xff]
      %v330 = vld [vmem:[%s242 + $0x80] sm:$0xff]
      %v331 = vld [vmem:[%s242 + $0x88] sm:$0xff]
      %v332 = vld [vmem:[%s242 + $0x90] sm:$0xff]
      %v333 = vld [vmem:[%s242 + $0x98] sm:$0xff]
      %v334 = vld [vmem:[%s242 + $0xa0] sm:$0xff]
      %v335 = vld [vmem:[%s242 + $0xa8] sm:$0xff]
      %v336 = vld [vmem:[%s242 + $0xb0] sm:$0xff]
      %v337 = vld [vmem:[%s242 + $0xb8] sm:$0xff]
      %v338 = vld [vmem:[%s242 + $0xc0] sm:$0xff]
      %v339 = vld [vmem:[%s242 + $0xc8] sm:$0xff]
      %v340 = vld [vmem:[%s242 + $0xd0] sm:$0xff]
      %v341 = vld [vmem:[%s242 + $0xd8] sm:$0xff]
      %v342 = vld [vmem:[%s247] sm:$0xff]
      %v343 = vld [vmem:[%s247 + $0x8] sm:$0xff]
      %v344 = vld [vmem:[%s247 + $0x10] sm:$0xff]
      %v345 = vld [vmem:[%s247 + $0x18] sm:$0xff]
      %v346 = vld [vmem:[%s247 + $0x20] sm:$0xff]
      %v347 = vld [vmem:[%s247 + $0x28] sm:$0xff]
      %v348 = vld [vmem:[%s247 + $0x30] sm:$0xff]
      %v349 = vld [vmem:[%s247 + $0x38] sm:$0xff]
      %v350 = vld [vmem:[%s247 + $0x40] sm:$0xff]
      %v351 = vld [vmem:[%s247 + $0x48] sm:$0xff]
      %v352 = vld [vmem:[%s247 + $0x50] sm:$0xff]
      %v353 = vld [vmem:[%s247 + $0x58] sm:$0xff]
      %v354 = vld [vmem:[%s247 + $0x60] sm:$0xff]
      %v355 = vld [vmem:[%s247 + $0x68] sm:$0xff]
      %v356 = vld [vmem:[%s247 + $0x70] sm:$0xff]
      %v357 = vld [vmem:[%s247 + $0x78] sm:$0xff]
      %v358 = vld [vmem:[%s247 + $0x80] sm:$0xff]
      %v359 = vld [vmem:[%s247 + $0x88] sm:$0xff]
      %v360 = vld [vmem:[%s247 + $0x90] sm:$0xff]
      %v361 = vld [vmem:[%s247 + $0x98] sm:$0xff]
      %v362 = vld [vmem:[%s247 + $0xa0] sm:$0xff]
      %v363 = vld [vmem:[%s247 + $0xa8] sm:$0xff]
      %v364 = vld [vmem:[%s247 + $0xb0] sm:$0xff]
      %v365 = vld [vmem:[%s247 + $0xb8] sm:$0xff]
      %v366 = vld [vmem:[%s247 + $0xc0] sm:$0xff]
      %v367 = vld [vmem:[%s247 + $0xc8] sm:$0xff]
      %v368 = vld [vmem:[%s247 + $0xd0] sm:$0xff]
      %v369 = vld [vmem:[%s247 + $0xd8] sm:$0xff]
      %v370 = vld [vmem:[%s252] sm:$0xff]
      %v371 = vld [vmem:[%s252 + $0x8] sm:$0xff]
      %v372 = vld [vmem:[%s252 + $0x10] sm:$0xff]
      %v373 = vld [vmem:[%s252 + $0x18] sm:$0xff]
      %v374 = vld [vmem:[%s252 + $0x20] sm:$0xff]
      %v375 = vld [vmem:[%s252 + $0x28] sm:$0xff]
      %v376 = vld [vmem:[%s252 + $0x30] sm:$0xff]
      %vm377 = vcmask 261120
      %v379 = vsel %vm377, %v286, 0
      %v382 = vsel %vm377, %v287, 0
      %v385 = vsel %vm377, %v288, 0
      %v388 = vsel %vm377, %v289, 0
      %v391 = vsel %vm377, %v290, 0
      %v394 = vsel %vm377, %v291, 0
      %v397 = vsel %vm377, %v292, 0
      %v400 = vsel %vm377, %v314, 0
      %v403 = vsel %vm377, %v315, 0
      %v406 = vsel %vm377, %v316, 0
      %v409 = vsel %vm377, %v317, 0
      %v412 = vsel %vm377, %v318, 0
      %v415 = vsel %vm377, %v319, 0
      %v418 = vsel %vm377, %v320, 0
      %420 = vmatpush.xpose.msra.mxu0 0.0
      %421 = vmatpush.xpose.msra.mxu0 0.0
      %422 = vmatpush.xpose.msra.mxu0 0.0
      %423 = vmatpush.xpose.msra.mxu0 0.0
      %424 = vmatpush.xpose.msra.mxu0 0.0
      %425 = vmatpush.xpose.msra.mxu0 0.0
      %426 = vmatpush.xpose.msra.mxu0 0.0
      %427 = vmatpush.xpose.msra.mxu0 0.0
      %428 = vmatpush.xpose.msra.mxu0 0.0
      %429 = vmatpush.xpose.msra.mxu0 %v418
      %430 = vmatpush.xpose.msra.mxu0 %v415
      %431 = vmatpush.xpose.msra.mxu0 %v412
      %432 = vmatpush.xpose.msra.mxu0 %v409
      %433 = vmatpush.xpose.msra.mxu0 %v406
      %434 = vmatpush.xpose.msra.mxu0 %v403
      %435 = vmatpush.xpose.msra.mxu0 %v400
      %436 = vmatmul.f32.gmra.mxu0 %v379
      %v437 = vpop.f32.mrf.mxu0
      %v438 = vadd.f32 %v370, %v437
      %439 = vmatmul.f32.gmra.mxu0 %v382
      %v440 = vpop.f32.mrf.mxu0
      %v441 = vadd.f32 %v371, %v440
      %442 = vmatmul.f32.gmra.mxu0 %v385
      %v443 = vpop.f32.mrf.mxu0
      %v444 = vadd.f32 %v372, %v443
      %445 = vmatmul.f32.gmra.mxu0 %v388
      %v446 = vpop.f32.mrf.mxu0
      %v447 = vadd.f32 %v373, %v446
      %448 = vmatmul.f32.gmra.mxu0 %v391
      %v449 = vpop.f32.mrf.mxu0
      %v450 = vadd.f32 %v374, %v449
      %451 = vmatmul.f32.gmra.mxu0 %v394
      %v452 = vpop.f32.mrf.mxu0
      %v453 = vadd.f32 %v375, %v452
      %454 = vmatmul.f32.gmra.mxu0 %v397
      %v455 = vpop.f32.mrf.mxu0
      %v456 = vadd.f32 %v376, %v455
      %457 = vdwg.mxu0
      %v459 = vsel %vm377, %v293, 0
      %v462 = vsel %vm377, %v294, 0
      %v465 = vsel %vm377, %v295, 0
      %v468 = vsel %vm377, %v296, 0
      %v471 = vsel %vm377, %v297, 0
      %v474 = vsel %vm377, %v298, 0
      %v477 = vsel %vm377, %v299, 0
      %v480 = vsel %vm377, %v321, 0
      %v483 = vsel %vm377, %v322, 0
      %v486 = vsel %vm377, %v323, 0
      %v489 = vsel %vm377, %v324, 0
      %v492 = vsel %vm377, %v325, 0
      %v495 = vsel %vm377, %v326, 0
      %v498 = vsel %vm377, %v327, 0
      %500 = vmatpush.xpose.msra.mxu0 0.0
      %501 = vmatpush.xpose.msra.mxu0 0.0
      %502 = vmatpush.xpose.msra.mxu0 0.0
      %503 = vmatpush.xpose.msra.mxu0 0.0
      %504 = vmatpush.xpose.msra.mxu0 0.0
      %505 = vmatpush.xpose.msra.mxu0 0.0
      %506 = vmatpush.xpose.msra.mxu0 0.0
      %507 = vmatpush.xpose.msra.mxu0 0.0
      %508 = vmatpush.xpose.msra.mxu0 0.0
      %509 = vmatpush.xpose.msra.mxu0 %v498
      %510 = vmatpush.xpose.msra.mxu0 %v495
      %511 = vmatpush.xpose.msra.mxu0 %v492
      %512 = vmatpush.xpose.msra.mxu0 %v489
      %513 = vmatpush.xpose.msra.mxu0 %v486
      %514 = vmatpush.xpose.msra.mxu0 %v483
      %515 = vmatpush.xpose.msra.mxu0 %v480
      %516 = vmatmul.f32.gmra.mxu0 %v459
      %v517 = vpop.f32.mrf.mxu0
      %v518 = vadd.f32 %v370, %v517
      %519 = vmatmul.f32.gmra.mxu0 %v462
      %v520 = vpop.f32.mrf.mxu0
      %v521 = vadd.f32 %v371, %v520
      %522 = vmatmul.f32.gmra.mxu0 %v465
      %v523 = vpop.f32.mrf.mxu0
      %v524 = vadd.f32 %v372, %v523
      %525 = vmatmul.f32.gmra.mxu0 %v468
      %v526 = vpop.f32.mrf.mxu0
      %v527 = vadd.f32 %v373, %v526
      %528 = vmatmul.f32.gmra.mxu0 %v471
      %v529 = vpop.f32.mrf.mxu0
      %v530 = vadd.f32 %v374, %v529
      %531 = vmatmul.f32.gmra.mxu0 %v474
      %v532 = vpop.f32.mrf.mxu0
      %v533 = vadd.f32 %v375, %v532
      %534 = vmatmul.f32.gmra.mxu0 %v477
      %v535 = vpop.f32.mrf.mxu0
      %v536 = vadd.f32 %v376, %v535
      %537 = vdwg.mxu0
      %v539 = vsel %vm377, %v300, 0
      %v542 = vsel %vm377, %v301, 0
      %v545 = vsel %vm377, %v302, 0
      %v548 = vsel %vm377, %v303, 0
      %v551 = vsel %vm377, %v304, 0
      %v554 = vsel %vm377, %v305, 0
      %v557 = vsel %vm377, %v306, 0
      %v560 = vsel %vm377, %v328, 0
      %v563 = vsel %vm377, %v329, 0
      %v566 = vsel %vm377, %v330, 0
      %v569 = vsel %vm377, %v331, 0
      %v572 = vsel %vm377, %v332, 0
      %v575 = vsel %vm377, %v333, 0
      %v578 = vsel %vm377, %v334, 0
      %580 = vmatpush.xpose.msra.mxu0 0.0
      %581 = vmatpush.xpose.msra.mxu0 0.0
      %582 = vmatpush.xpose.msra.mxu0 0.0
      %583 = vmatpush.xpose.msra.mxu0 0.0
      %584 = vmatpush.xpose.msra.mxu0 0.0
      %585 = vmatpush.xpose.msra.mxu0 0.0
      %586 = vmatpush.xpose.msra.mxu0 0.0
      %587 = vmatpush.xpose.msra.mxu0 0.0
      %588 = vmatpush.xpose.msra.mxu0 0.0
      %589 = vmatpush.xpose.msra.mxu0 %v578
      %590 = vmatpush.xpose.msra.mxu0 %v575
      %591 = vmatpush.xpose.msra.mxu0 %v572
      %592 = vmatpush.xpose.msra.mxu0 %v569
      %593 = vmatpush.xpose.msra.mxu0 %v566
      %594 = vmatpush.xpose.msra.mxu0 %v563
      %595 = vmatpush.xpose.msra.mxu0 %v560
      %596 = vmatmul.f32.gmra.mxu0 %v539
      %v597 = vpop.f32.mrf.mxu0
      %v598 = vadd.f32 %v370, %v597
      %599 = vmatmul.f32.gmra.mxu0 %v542
      %v600 = vpop.f32.mrf.mxu0
      %v601 = vadd.f32 %v371, %v600
      %602 = vmatmul.f32.gmra.mxu0 %v545
      %v603 = vpop.f32.mrf.mxu0
      %v604 = vadd.f32 %v372, %v603
      %605 = vmatmul.f32.gmra.mxu0 %v548
      %v606 = vpop.f32.mrf.mxu0
      %v607 = vadd.f32 %v373, %v606
      %608 = vmatmul.f32.gmra.mxu0 %v551
      %v609 = vpop.f32.mrf.mxu0
      %v610 = vadd.f32 %v374, %v609
      %611 = vmatmul.f32.gmra.mxu0 %v554
      %v612 = vpop.f32.mrf.mxu0
      %v613 = vadd.f32 %v375, %v612
      %614 = vmatmul.f32.gmra.mxu0 %v557
      %v615 = vpop.f32.mrf.mxu0
      %v616 = vadd.f32 %v376, %v615
      %617 = vdwg.mxu0
      %v619 = vsel %vm377, %v307, 0
      %v622 = vsel %vm377, %v308, 0
      %v625 = vsel %vm377, %v309, 0
      %v628 = vsel %vm377, %v310, 0
      %v631 = vsel %vm377, %v311, 0
      %v634 = vsel %vm377, %v312, 0
      %v637 = vsel %vm377, %v313, 0
      %v640 = vsel %vm377, %v335, 0
      %v643 = vsel %vm377, %v336, 0
      %v646 = vsel %vm377, %v337, 0
      %v649 = vsel %vm377, %v338, 0
      %v652 = vsel %vm377, %v339, 0
      %v655 = vsel %vm377, %v340, 0
      %v658 = vsel %vm377, %v341, 0
      %660 = vmatpush.xpose.msra.mxu0 0.0
      %661 = vmatpush.xpose.msra.mxu0 0.0
      %662 = vmatpush.xpose.msra.mxu0 0.0
      %663 = vmatpush.xpose.msra.mxu0 0.0
      %664 = vmatpush.xpose.msra.mxu0 0.0
      %665 = vmatpush.xpose.msra.mxu0 0.0
      %666 = vmatpush.xpose.msra.mxu0 0.0
      %667 = vmatpush.xpose.msra.mxu0 0.0
      %668 = vmatpush.xpose.msra.mxu0 0.0
      %669 = vmatpush.xpose.msra.mxu0 %v658
      %670 = vmatpush.xpose.msra.mxu0 %v655
      %671 = vmatpush.xpose.msra.mxu0 %v652
      %672 = vmatpush.xpose.msra.mxu0 %v649
      %673 = vmatpush.xpose.msra.mxu0 %v646
      %674 = vmatpush.xpose.msra.mxu0 %v643
      %675 = vmatpush.xpose.msra.mxu0 %v640
      %676 = vmatmul.f32.gmra.mxu0 %v619
      %v677 = vpop.f32.mrf.mxu0
      %v678 = vadd.f32 %v370, %v677
      %679 = vmatmul.f32.gmra.mxu0 %v622
      %v680 = vpop.f32.mrf.mxu0
      %v681 = vadd.f32 %v371, %v680
      %682 = vmatmul.f32.gmra.mxu0 %v625
      %v683 = vpop.f32.mrf.mxu0
      %v684 = vadd.f32 %v372, %v683
      %685 = vmatmul.f32.gmra.mxu0 %v628
      %v686 = vpop.f32.mrf.mxu0
      %v687 = vadd.f32 %v373, %v686
      %688 = vmatmul.f32.gmra.mxu0 %v631
      %v689 = vpop.f32.mrf.mxu0
      %v690 = vadd.f32 %v374, %v689
      %691 = vmatmul.f32.gmra.mxu0 %v634
      %v692 = vpop.f32.mrf.mxu0
      %v693 = vadd.f32 %v375, %v692
      %694 = vmatmul.f32.gmra.mxu0 %v637
      %v695 = vpop.f32.mrf.mxu0
      %v696 = vadd.f32 %v376, %v695
      %697 = vdwg.mxu0
      %vm698 = vcmask 457728
      %v699 = vsel %vm698, %v438, -inf
      %700 = vmax.xlane.f32.xlu0 %v699
      %v701 = vpop.xlane.xlu0 %700
      %v702 = vsel %vm698, %v441, -inf
      %703 = vmax.xlane.f32.xlu0 %v702
      %v704 = vpop.xlane.xlu0 %703
      %v705 = vsel %vm698, %v444, -inf
      %706 = vmax.xlane.f32.xlu0 %v705
      %v707 = vpop.xlane.xlu0 %706
      %v708 = vsel %vm698, %v447, -inf
      %709 = vmax.xlane.f32.xlu0 %v708
      %v710 = vpop.xlane.xlu0 %709
      %v711 = vsel %vm698, %v450, -inf
      %712 = vmax.xlane.f32.xlu0 %v711
      %v713 = vpop.xlane.xlu0 %712
      %v714 = vsel %vm698, %v453, -inf
      %715 = vmax.xlane.f32.xlu0 %v714
      %v716 = vpop.xlane.xlu0 %715
      %v717 = vsel %vm698, %v456, -inf
      %718 = vmax.xlane.f32.xlu0 %v717
      %v719 = vpop.xlane.xlu0 %718
      %v720 = vsel %vm698, %v518, -inf
      %721 = vmax.xlane.f32.xlu0 %v720
      %v722 = vpop.xlane.xlu0 %721
      %v723 = vsel %vm698, %v521, -inf
      %724 = vmax.xlane.f32.xlu0 %v723
      %v725 = vpop.xlane.xlu0 %724
      %v726 = vsel %vm698, %v524, -inf
      %727 = vmax.xlane.f32.xlu0 %v726
      %v728 = vpop.xlane.xlu0 %727
      %v729 = vsel %vm698, %v527, -inf
      %730 = vmax.xlane.f32.xlu0 %v729
      %v731 = vpop.xlane.xlu0 %730
      %v732 = vsel %vm698, %v530, -inf
      %733 = vmax.xlane.f32.xlu0 %v732
      %v734 = vpop.xlane.xlu0 %733
      %v735 = vsel %vm698, %v533, -inf
      %736 = vmax.xlane.f32.xlu0 %v735
      %v737 = vpop.xlane.xlu0 %736
      %v738 = vsel %vm698, %v536, -inf
      %739 = vmax.xlane.f32.xlu0 %v738
      %v740 = vpop.xlane.xlu0 %739
      %v741 = vsel %vm698, %v598, -inf
      %742 = vmax.xlane.f32.xlu0 %v741
      %v743 = vpop.xlane.xlu0 %742
      %v744 = vsel %vm698, %v601, -inf
      %745 = vmax.xlane.f32.xlu0 %v744
      %v746 = vpop.xlane.xlu0 %745
      %v747 = vsel %vm698, %v604, -inf
      %748 = vmax.xlane.f32.xlu0 %v747
      %v749 = vpop.xlane.xlu0 %748
      %v750 = vsel %vm698, %v607, -inf
      %751 = vmax.xlane.f32.xlu0 %v750
      %v752 = vpop.xlane.xlu0 %751
      %v753 = vsel %vm698, %v610, -inf
      %754 = vmax.xlane.f32.xlu0 %v753
      %v755 = vpop.xlane.xlu0 %754
      %v756 = vsel %vm698, %v613, -inf
      %757 = vmax.xlane.f32.xlu0 %v756
      %v758 = vpop.xlane.xlu0 %757
      %v759 = vsel %vm698, %v616, -inf
      %760 = vmax.xlane.f32.xlu0 %v759
      %v761 = vpop.xlane.xlu0 %760
      %v762 = vsel %vm698, %v678, -inf
      %763 = vmax.xlane.f32.xlu0 %v762
      %v764 = vpop.xlane.xlu0 %763
      %v765 = vsel %vm698, %v681, -inf
      %766 = vmax.xlane.f32.xlu0 %v765
      %v767 = vpop.xlane.xlu0 %766
      %v768 = vsel %vm698, %v684, -inf
      %769 = vmax.xlane.f32.xlu0 %v768
      %v770 = vpop.xlane.xlu0 %769
      %v771 = vsel %vm698, %v687, -inf
      %772 = vmax.xlane.f32.xlu0 %v771
      %v773 = vpop.xlane.xlu0 %772
      %v774 = vsel %vm698, %v690, -inf
      %775 = vmax.xlane.f32.xlu0 %v774
      %v776 = vpop.xlane.xlu0 %775
      %v777 = vsel %vm698, %v693, -inf
      %778 = vmax.xlane.f32.xlu0 %v777
      %v779 = vpop.xlane.xlu0 %778
      %v780 = vsel %vm698, %v696, -inf
      %781 = vmax.xlane.f32.xlu0 %v780
      %v782 = vpop.xlane.xlu0 %781
      %v783 = vsub.f32 %v438, %v701
      %v784 = vsub.f32 %v441, %v704
      %v785 = vsub.f32 %v444, %v707
      %v786 = vsub.f32 %v447, %v710
      %v787 = vsub.f32 %v450, %v713
      %v788 = vsub.f32 %v453, %v716
      %v789 = vsub.f32 %v456, %v719
      %v790 = vsub.f32 %v518, %v722
      %v791 = vsub.f32 %v521, %v725
      %v792 = vsub.f32 %v524, %v728
      %v793 = vsub.f32 %v527, %v731
      %v794 = vsub.f32 %v530, %v734
      %v795 = vsub.f32 %v533, %v737
      %v796 = vsub.f32 %v536, %v740
      %v797 = vsub.f32 %v598, %v743
      %v798 = vsub.f32 %v601, %v746
      %v799 = vsub.f32 %v604, %v749
      %v800 = vsub.f32 %v607, %v752
      %v801 = vsub.f32 %v610, %v755
      %v802 = vsub.f32 %v613, %v758
      %v803 = vsub.f32 %v616, %v761
      %v804 = vsub.f32 %v678, %v764
      %v805 = vsub.f32 %v681, %v767
      %v806 = vsub.f32 %v684, %v770
      %v807 = vsub.f32 %v687, %v773
      %v808 = vsub.f32 %v690, %v776
      %v809 = vsub.f32 %v693, %v779
      %v810 = vsub.f32 %v696, %v782
      %v811 = vmul.f32 %v783, 1.442695
      %v812 = vpow.pop %v811
      %v813 = vmul.f32 %v784, 1.442695
      %v814 = vpow.pop %v813
      %v815 = vmul.f32 %v785, 1.442695
      %v816 = vpow.pop %v815
      %v817 = vmul.f32 %v786, 1.442695
      %v818 = vpow.pop %v817
      %v819 = vmul.f32 %v787, 1.442695
      %v820 = vpow.pop %v819
      %v821 = vmul.f32 %v788, 1.442695
      %v822 = vpow.pop %v821
      %v823 = vmul.f32 %v789, 1.442695
      %v824 = vpow.pop %v823
      %v825 = vmul.f32 %v790, 1.442695
      %v826 = vpow.pop %v825
      %v827 = vmul.f32 %v791, 1.442695
      %v828 = vpow.pop %v827
      %v829 = vmul.f32 %v792, 1.442695
      %v830 = vpow.pop %v829
      %v831 = vmul.f32 %v793, 1.442695
      %v832 = vpow.pop %v831
      %v833 = vmul.f32 %v794, 1.442695
      %v834 = vpow.pop %v833
      %v835 = vmul.f32 %v795, 1.442695
      %v836 = vpow.pop %v835
      %v837 = vmul.f32 %v796, 1.442695
      %v838 = vpow.pop %v837
      %v839 = vmul.f32 %v797, 1.442695
      %v840 = vpow.pop %v839
      %v841 = vmul.f32 %v798, 1.442695
      %v842 = vpow.pop %v841
      %v843 = vmul.f32 %v799, 1.442695
      %v844 = vpow.pop %v843
      %v845 = vmul.f32 %v800, 1.442695
      %v846 = vpow.pop %v845
      %v847 = vmul.f32 %v801, 1.442695
      %v848 = vpow.pop %v847
      %v849 = vmul.f32 %v802, 1.442695
      %v850 = vpow.pop %v849
      %v851 = vmul.f32 %v803, 1.442695
      %v852 = vpow.pop %v851
      %v853 = vmul.f32 %v804, 1.442695
      %v854 = vpow.pop %v853
      %v855 = vmul.f32 %v805, 1.442695
      %v856 = vpow.pop %v855
      %v857 = vmul.f32 %v806, 1.442695
      %v858 = vpow.pop %v857
      %v859 = vmul.f32 %v807, 1.442695
      %v860 = vpow.pop %v859
      %v861 = vmul.f32 %v808, 1.442695
      %v862 = vpow.pop %v861
      %v863 = vmul.f32 %v809, 1.442695
      %v864 = vpow.pop %v863
      %v865 = vmul.f32 %v810, 1.442695
      %v866 = vpow.pop %v865
      %v867 = vsel %vm698, %v812, 0.0
      %868 = vadd.xlane.f32.xlu0 %v867
      %v869 = vpop.xlane.xlu0 %868
      %v870 = vsel %vm698, %v814, 0.0
      %871 = vadd.xlane.f32.xlu0 %v870
      %v872 = vpop.xlane.xlu0 %871
      %v873 = vsel %vm698, %v816, 0.0
      %874 = vadd.xlane.f32.xlu0 %v873
      %v875 = vpop.xlane.xlu0 %874
      %v876 = vsel %vm698, %v818, 0.0
      %877 = vadd.xlane.f32.xlu0 %v876
      %v878 = vpop.xlane.xlu0 %877
      %v879 = vsel %vm698, %v820, 0.0
      %880 = vadd.xlane.f32.xlu0 %v879
      %v881 = vpop.xlane.xlu0 %880
      %v882 = vsel %vm698, %v822, 0.0
      %883 = vadd.xlane.f32.xlu0 %v882
      %v884 = vpop.xlane.xlu0 %883
      %v885 = vsel %vm698, %v824, 0.0
      %886 = vadd.xlane.f32.xlu0 %v885
      %v887 = vpop.xlane.xlu0 %886
      %v888 = vsel %vm698, %v826, 0.0
      %889 = vadd.xlane.f32.xlu0 %v888
      %v890 = vpop.xlane.xlu0 %889
      %v891 = vsel %vm698, %v828, 0.0
      %892 = vadd.xlane.f32.xlu0 %v891
      %v893 = vpop.xlane.xlu0 %892
      %v894 = vsel %vm698, %v830, 0.0
      %895 = vadd.xlane.f32.xlu0 %v894
      %v896 = vpop.xlane.xlu0 %895
      %v897 = vsel %vm698, %v832, 0.0
      %898 = vadd.xlane.f32.xlu0 %v897
      %v899 = vpop.xlane.xlu0 %898
      %v900 = vsel %vm698, %v834, 0.0
      %901 = vadd.xlane.f32.xlu0 %v900
      %v902 = vpop.xlane.xlu0 %901
      %v903 = vsel %vm698, %v836, 0.0
      %904 = vadd.xlane.f32.xlu0 %v903
      %v905 = vpop.xlane.xlu0 %904
      %v906 = vsel %vm698, %v838, 0.0
      %907 = vadd.xlane.f32.xlu0 %v906
      %v908 = vpop.xlane.xlu0 %907
      %v909 = vsel %vm698, %v840, 0.0
      %910 = vadd.xlane.f32.xlu0 %v909
      %v911 = vpop.xlane.xlu0 %910
      %v912 = vsel %vm698, %v842, 0.0
      %913 = vadd.xlane.f32.xlu0 %v912
      %v914 = vpop.xlane.xlu0 %913
      %v915 = vsel %vm698, %v844, 0.0
      %916 = vadd.xlane.f32.xlu0 %v915
      %v917 = vpop.xlane.xlu0 %916
      %v918 = vsel %vm698, %v846, 0.0
      %919 = vadd.xlane.f32.xlu0 %v918
      %v920 = vpop.xlane.xlu0 %919
      %v921 = vsel %vm698, %v848, 0.0
      %922 = vadd.xlane.f32.xlu0 %v921
      %v923 = vpop.xlane.xlu0 %922
      %v924 = vsel %vm698, %v850, 0.0
      %925 = vadd.xlane.f32.xlu0 %v924
      %v926 = vpop.xlane.xlu0 %925
      %v927 = vsel %vm698, %v852, 0.0
      %928 = vadd.xlane.f32.xlu0 %v927
      %v929 = vpop.xlane.xlu0 %928
      %v930 = vsel %vm698, %v854, 0.0
      %931 = vadd.xlane.f32.xlu0 %v930
      %v932 = vpop.xlane.xlu0 %931
      %v933 = vsel %vm698, %v856, 0.0
      %934 = vadd.xlane.f32.xlu0 %v933
      %v935 = vpop.xlane.xlu0 %934
      %v936 = vsel %vm698, %v858, 0.0
      %937 = vadd.xlane.f32.xlu0 %v936
      %v938 = vpop.xlane.xlu0 %937
      %v939 = vsel %vm698, %v860, 0.0
      %940 = vadd.xlane.f32.xlu0 %v939
      %v941 = vpop.xlane.xlu0 %940
      %v942 = vsel %vm698, %v862, 0.0
      %943 = vadd.xlane.f32.xlu0 %v942
      %v944 = vpop.xlane.xlu0 %943
      %v945 = vsel %vm698, %v864, 0.0
      %946 = vadd.xlane.f32.xlu0 %v945
      %v947 = vpop.xlane.xlu0 %946
      %v948 = vsel %vm698, %v866, 0.0
      %949 = vadd.xlane.f32.xlu0 %v948
      %v950 = vpop.xlane.xlu0 %949
      %v951 = vrcp.pop %v869
      %v952 = vrcp.pop %v872
      %v953 = vrcp.pop %v875
      %v954 = vrcp.pop %v878
      %v955 = vrcp.pop %v881
      %v956 = vrcp.pop %v884
      %v957 = vrcp.pop %v887
      %v958 = vrcp.pop %v890
      %v959 = vrcp.pop %v893
      %v960 = vrcp.pop %v896
      %v961 = vrcp.pop %v899
      %v962 = vrcp.pop %v902
      %v963 = vrcp.pop %v905
      %v964 = vrcp.pop %v908
      %v965 = vrcp.pop %v911
      %v966 = vrcp.pop %v914
      %v967 = vrcp.pop %v917
      %v968 = vrcp.pop %v920
      %v969 = vrcp.pop %v923
      %v970 = vrcp.pop %v926
      %v971 = vrcp.pop %v929
      %v972 = vrcp.pop %v932
      %v973 = vrcp.pop %v935
      %v974 = vrcp.pop %v938
      %v975 = vrcp.pop %v941
      %v976 = vrcp.pop %v944
      %v977 = vrcp.pop %v947
      %v978 = vrcp.pop %v950
      %v979 = vmul.f32 %v869, %v951
      %v980 = vmul.f32 %v872, %v952
      %v981 = vmul.f32 %v875, %v953
      %v982 = vmul.f32 %v878, %v954
      %v983 = vmul.f32 %v881, %v955
      %v984 = vmul.f32 %v884, %v956
      %v985 = vmul.f32 %v887, %v957
      %v986 = vmul.f32 %v890, %v958
      %v987 = vmul.f32 %v893, %v959
      %v988 = vmul.f32 %v896, %v960
      %v989 = vmul.f32 %v899, %v961
      %v990 = vmul.f32 %v902, %v962
      %v991 = vmul.f32 %v905, %v963
      %v992 = vmul.f32 %v908, %v964
      %v993 = vmul.f32 %v911, %v965
      %v994 = vmul.f32 %v914, %v966
      %v995 = vmul.f32 %v917, %v967
      %v996 = vmul.f32 %v920, %v968
      %v997 = vmul.f32 %v923, %v969
      %v998 = vmul.f32 %v926, %v970
      %v999 = vmul.f32 %v929, %v971
      %v1000 = vmul.f32 %v932, %v972
      %v1001 = vmul.f32 %v935, %v973
      %v1002 = vmul.f32 %v938, %v974
      %v1003 = vmul.f32 %v941, %v975
      %v1004 = vmul.f32 %v944, %v976
      %v1005 = vmul.f32 %v947, %v977
      %v1006 = vmul.f32 %v950, %v978
      %v1007 = vsub.f32 2.0, %v979
      %v1008 = vsub.f32 2.0, %v980
      %v1009 = vsub.f32 2.0, %v981
      %v1010 = vsub.f32 2.0, %v982
      %v1011 = vsub.f32 2.0, %v983
      %v1012 = vsub.f32 2.0, %v984
      %v1013 = vsub.f32 2.0, %v985
      %v1014 = vsub.f32 2.0, %v986
      %v1015 = vsub.f32 2.0, %v987
      %v1016 = vsub.f32 2.0, %v988
      %v1017 = vsub.f32 2.0, %v989
      %v1018 = vsub.f32 2.0, %v990
      %v1019 = vsub.f32 2.0, %v991
      %v1020 = vsub.f32 2.0, %v992
      %v1021 = vsub.f32 2.0, %v993
      %v1022 = vsub.f32 2.0, %v994
      %v1023 = vsub.f32 2.0, %v995
      %v1024 = vsub.f32 2.0, %v996
      %v1025 = vsub.f32 2.0, %v997
      %v1026 = vsub.f32 2.0, %v998
      %v1027 = vsub.f32 2.0, %v999
      %v1028 = vsub.f32 2.0, %v1000
      %v1029 = vsub.f32 2.0, %v1001
      %v1030 = vsub.f32 2.0, %v1002
      %v1031 = vsub.f32 2.0, %v1003
      %v1032 = vsub.f32 2.0, %v1004
      %v1033 = vsub.f32 2.0, %v1005
      %v1034 = vsub.f32 2.0, %v1006
      %v1035 = vmul.f32 %v951, %v1007
      %v1036 = vmul.f32 %v952, %v1008
      %v1037 = vmul.f32 %v953, %v1009
      %v1038 = vmul.f32 %v954, %v1010
      %v1039 = vmul.f32 %v955, %v1011
      %v1040 = vmul.f32 %v956, %v1012
      %v1041 = vmul.f32 %v957, %v1013
      %v1042 = vmul.f32 %v958, %v1014
      %v1043 = vmul.f32 %v959, %v1015
      %v1044 = vmul.f32 %v960, %v1016
      %v1045 = vmul.f32 %v961, %v1017
      %v1046 = vmul.f32 %v962, %v1018
      %v1047 = vmul.f32 %v963, %v1019
      %v1048 = vmul.f32 %v964, %v1020
      %v1049 = vmul.f32 %v965, %v1021
      %v1050 = vmul.f32 %v966, %v1022
      %v1051 = vmul.f32 %v967, %v1023
      %v1052 = vmul.f32 %v968, %v1024
      %v1053 = vmul.f32 %v969, %v1025
      %v1054 = vmul.f32 %v970, %v1026
      %v1055 = vmul.f32 %v971, %v1027
      %v1056 = vmul.f32 %v972, %v1028
      %v1057 = vmul.f32 %v973, %v1029
      %v1058 = vmul.f32 %v974, %v1030
      %v1059 = vmul.f32 %v975, %v1031
      %v1060 = vmul.f32 %v976, %v1032
      %v1061 = vmul.f32 %v977, %v1033
      %v1062 = vmul.f32 %v978, %v1034
      %v1064 = vsel %vm698, %v812, 0
      %v1067 = vsel %vm698, %v814, 0
      %v1070 = vsel %vm698, %v816, 0
      %v1073 = vsel %vm698, %v818, 0
      %v1076 = vsel %vm698, %v820, 0
      %v1079 = vsel %vm698, %v822, 0
      %v1082 = vsel %vm698, %v824, 0
      %1084 = vmatpush.msra.mxu0 0.0
      %1085 = vmatpush.msra.mxu0 0.0
      %1086 = vmatpush.msra.mxu0 0.0
      %1087 = vmatpush.msra.mxu0 0.0
      %1088 = vmatpush.msra.mxu0 0.0
      %1089 = vmatpush.msra.mxu0 0.0
      %1090 = vmatpush.msra.mxu0 0.0
      %1091 = vmatpush.msra.mxu0 0.0
      %1092 = vmatpush.msra.mxu0 0.0
      %1093 = vmatpush.msra.mxu0 %v348
      %1094 = vmatpush.msra.mxu0 %v347
      %1095 = vmatpush.msra.mxu0 %v346
      %1096 = vmatpush.msra.mxu0 %v345
      %1097 = vmatpush.msra.mxu0 %v344
      %1098 = vmatpush.msra.mxu0 %v343
      %1099 = vmatpush.msra.mxu0 %v342
      %1100 = vmatmul.f32.gmra.mxu0 %v1064
      %v1101 = vpop.f32.mrf.mxu0
      %v1102 = vadd.f32 0.0, %v1101
      %1103 = vmatmul.f32.gmra.mxu0 %v1067
      %v1104 = vpop.f32.mrf.mxu0
      %v1105 = vadd.f32 0.0, %v1104
      %1106 = vmatmul.f32.gmra.mxu0 %v1070
      %v1107 = vpop.f32.mrf.mxu0
      %v1108 = vadd.f32 0.0, %v1107
      %1109 = vmatmul.f32.gmra.mxu0 %v1073
      %v1110 = vpop.f32.mrf.mxu0
      %v1111 = vadd.f32 0.0, %v1110
      %1112 = vmatmul.f32.gmra.mxu0 %v1076
      %v1113 = vpop.f32.mrf.mxu0
      %v1114 = vadd.f32 0.0, %v1113
      %1115 = vmatmul.f32.gmra.mxu0 %v1079
      %v1116 = vpop.f32.mrf.mxu0
      %v1117 = vadd.f32 0.0, %v1116
      %1118 = vmatmul.f32.gmra.mxu0 %v1082
      %v1119 = vpop.f32.mrf.mxu0
      %v1120 = vadd.f32 0.0, %v1119
      %1121 = vdwg.mxu0
      %v1123 = vsel %vm698, %v826, 0
      %v1126 = vsel %vm698, %v828, 0
      %v1129 = vsel %vm698, %v830, 0
      %v1132 = vsel %vm698, %v832, 0
      %v1135 = vsel %vm698, %v834, 0
      %v1138 = vsel %vm698, %v836, 0
      %v1141 = vsel %vm698, %v838, 0
      %1143 = vmatpush.msra.mxu0 0.0
      %1144 = vmatpush.msra.mxu0 0.0
      %1145 = vmatpush.msra.mxu0 0.0
      %1146 = vmatpush.msra.mxu0 0.0
      %1147 = vmatpush.msra.mxu0 0.0
      %1148 = vmatpush.msra.mxu0 0.0
      %1149 = vmatpush.msra.mxu0 0.0
      %1150 = vmatpush.msra.mxu0 0.0
      %1151 = vmatpush.msra.mxu0 0.0
      %1152 = vmatpush.msra.mxu0 %v355
      %1153 = vmatpush.msra.mxu0 %v354
      %1154 = vmatpush.msra.mxu0 %v353
      %1155 = vmatpush.msra.mxu0 %v352
      %1156 = vmatpush.msra.mxu0 %v351
      %1157 = vmatpush.msra.mxu0 %v350
      %1158 = vmatpush.msra.mxu0 %v349
      %1159 = vmatmul.f32.gmra.mxu0 %v1123
      %v1160 = vpop.f32.mrf.mxu0
      %v1161 = vadd.f32 0.0, %v1160
      %1162 = vmatmul.f32.gmra.mxu0 %v1126
      %v1163 = vpop.f32.mrf.mxu0
      %v1164 = vadd.f32 0.0, %v1163
      %1165 = vmatmul.f32.gmra.mxu0 %v1129
      %v1166 = vpop.f32.mrf.mxu0
      %v1167 = vadd.f32 0.0, %v1166
      %1168 = vmatmul.f32.gmra.mxu0 %v1132
      %v1169 = vpop.f32.mrf.mxu0
      %v1170 = vadd.f32 0.0, %v1169
      %1171 = vmatmul.f32.gmra.mxu0 %v1135
      %v1172 = vpop.f32.mrf.mxu0
      %v1173 = vadd.f32 0.0, %v1172
      %1174 = vmatmul.f32.gmra.mxu0 %v1138
      %v1175 = vpop.f32.mrf.mxu0
      %v1176 = vadd.f32 0.0, %v1175
      %1177 = vmatmul.f32.gmra.mxu0 %v1141
      %v1178 = vpop.f32.mrf.mxu0
      %v1179 = vadd.f32 0.0, %v1178
      %1180 = vdwg.mxu0
      %v1182 = vsel %vm698, %v840, 0
      %v1185 = vsel %vm698, %v842, 0
      %v1188 = vsel %vm698, %v844, 0
      %v1191 = vsel %vm698, %v846, 0
      %v1194 = vsel %vm698, %v848, 0
      %v1197 = vsel %vm698, %v850, 0
      %v1200 = vsel %vm698, %v852, 0
      %1202 = vmatpush.msra.mxu0 0.0
      %1203 = vmatpush.msra.mxu0 0.0
      %1204 = vmatpush.msra.mxu0 0.0
      %1205 = vmatpush.msra.mxu0 0.0
      %1206 = vmatpush.msra.mxu0 0.0
      %1207 = vmatpush.msra.mxu0 0.0
      %1208 = vmatpush.msra.mxu0 0.0
      %1209 = vmatpush.msra.mxu0 0.0
      %1210 = vmatpush.msra.mxu0 0.0
      %1211 = vmatpush.msra.mxu0 %v362
      %1212 = vmatpush.msra.mxu0 %v361
      %1213 = vmatpush.msra.mxu0 %v360
      %1214 = vmatpush.msra.mxu0 %v359
      %1215 = vmatpush.msra.mxu0 %v358
      %1216 = vmatpush.msra.mxu0 %v357
      %1217 = vmatpush.msra.mxu0 %v356
      %1218 = vmatmul.f32.gmra.mxu0 %v1182
      %v1219 = vpop.f32.mrf.mxu0
      %v1220 = vadd.f32 0.0, %v1219
      %1221 = vmatmul.f32.gmra.mxu0 %v1185
      %v1222 = vpop.f32.mrf.mxu0
      %v1223 = vadd.f32 0.0, %v1222
      %1224 = vmatmul.f32.gmra.mxu0 %v1188
      %v1225 = vpop.f32.mrf.mxu0
      %v1226 = vadd.f32 0.0, %v1225
      %1227 = vmatmul.f32.gmra.mxu0 %v1191
      %v1228 = vpop.f32.mrf.mxu0
      %v1229 = vadd.f32 0.0, %v1228
      %1230 = vmatmul.f32.gmra.mxu0 %v1194
      %v1231 = vpop.f32.mrf.mxu0
      %v1232 = vadd.f32 0.0, %v1231
      %1233 = vmatmul.f32.gmra.mxu0 %v1197
      %v1234 = vpop.f32.mrf.mxu0
      %v1235 = vadd.f32 0.0, %v1234
      %1236 = vmatmul.f32.gmra.mxu0 %v1200
      %v1237 = vpop.f32.mrf.mxu0
      %v1238 = vadd.f32 0.0, %v1237
      %1239 = vdwg.mxu0
      %v1241 = vsel %vm698, %v854, 0
      %v1244 = vsel %vm698, %v856, 0
      %v1247 = vsel %vm698, %v858, 0
      %v1250 = vsel %vm698, %v860, 0
      %v1253 = vsel %vm698, %v862, 0
      %v1256 = vsel %vm698, %v864, 0
      %v1259 = vsel %vm698, %v866, 0
      %1261 = vmatpush.msra.mxu0 0.0
      %1262 = vmatpush.msra.mxu0 0.0
      %1263 = vmatpush.msra.mxu0 0.0
      %1264 = vmatpush.msra.mxu0 0.0
      %1265 = vmatpush.msra.mxu0 0.0
      %1266 = vmatpush.msra.mxu0 0.0
      %1267 = vmatpush.msra.mxu0 0.0
      %1268 = vmatpush.msra.mxu0 0.0
      %1269 = vmatpush.msra.mxu0 0.0
      %1270 = vmatpush.msra.mxu0 %v369
      %1271 = vmatpush.msra.mxu0 %v368
      %1272 = vmatpush.msra.mxu0 %v367
      %1273 = vmatpush.msra.mxu0 %v366
      %1274 = vmatpush.msra.mxu0 %v365
      %1275 = vmatpush.msra.mxu0 %v364
      %1276 = vmatpush.msra.mxu0 %v363
      %1277 = vmatmul.f32.gmra.mxu0 %v1241
      %v1278 = vpop.f32.mrf.mxu0
      %v1279 = vadd.f32 0.0, %v1278
      %1280 = vmatmul.f32.gmra.mxu0 %v1244
      %v1281 = vpop.f32.mrf.mxu0
      %v1282 = vadd.f32 0.0, %v1281
      %1283 = vmatmul.f32.gmra.mxu0 %v1247
      %v1284 = vpop.f32.mrf.mxu0
      %v1285 = vadd.f32 0.0, %v1284
      %1286 = vmatmul.f32.gmra.mxu0 %v1250
      %v1287 = vpop.f32.mrf.mxu0
      %v1288 = vadd.f32 0.0, %v1287
      %1289 = vmatmul.f32.gmra.mxu0 %v1253
      %v1290 = vpop.f32.mrf.mxu0
      %v1291 = vadd.f32 0.0, %v1290
      %1292 = vmatmul.f32.gmra.mxu0 %v1256
      %v1293 = vpop.f32.mrf.mxu0
      %v1294 = vadd.f32 0.0, %v1293
      %1295 = vmatmul.f32.gmra.mxu0 %v1259
      %v1296 = vpop.f32.mrf.mxu0
      %v1297 = vadd.f32 0.0, %v1296
      %1298 = vdwg.mxu0
      %v1299 = vmul.f32 %v1102, %v1035
      %v1300 = vmul.f32 %v1105, %v1036
      %v1301 = vmul.f32 %v1108, %v1037
      %v1302 = vmul.f32 %v1111, %v1038
      %v1303 = vmul.f32 %v1114, %v1039
      %v1304 = vmul.f32 %v1117, %v1040
      %v1305 = vmul.f32 %v1120, %v1041
      %v1306 = vmul.f32 %v1161, %v1042
      %v1307 = vmul.f32 %v1164, %v1043
      %v1308 = vmul.f32 %v1167, %v1044
      %v1309 = vmul.f32 %v1170, %v1045
      %v1310 = vmul.f32 %v1173, %v1046
      %v1311 = vmul.f32 %v1176, %v1047
      %v1312 = vmul.f32 %v1179, %v1048
      %v1313 = vmul.f32 %v1220, %v1049
      %v1314 = vmul.f32 %v1223, %v1050
      %v1315 = vmul.f32 %v1226, %v1051
      %v1316 = vmul.f32 %v1229, %v1052
      %v1317 = vmul.f32 %v1232, %v1053
      %v1318 = vmul.f32 %v1235, %v1054
      %v1319 = vmul.f32 %v1238, %v1055
      %v1320 = vmul.f32 %v1279, %v1056
      %v1321 = vmul.f32 %v1282, %v1057
      %v1322 = vmul.f32 %v1285, %v1058
      %v1323 = vmul.f32 %v1288, %v1059
      %v1324 = vmul.f32 %v1291, %v1060
      %v1325 = vmul.f32 %v1294, %v1061
      %v1326 = vmul.f32 %v1297, %v1062
      %1327 = vst.msk [vmem:[%s257] sm:$0xff] %vm377, %v1299
      %1328 = vst.msk [vmem:[%s257 + $0x8] sm:$0xff] %vm377, %v1300
      %1329 = vst.msk [vmem:[%s257 + $0x10] sm:$0xff] %vm377, %v1301
      %1330 = vst.msk [vmem:[%s257 + $0x18] sm:$0xff] %vm377, %v1302
      %1331 = vst.msk [vmem:[%s257 + $0x20] sm:$0xff] %vm377, %v1303
      %1332 = vst.msk [vmem:[%s257 + $0x28] sm:$0xff] %vm377, %v1304
      %1333 = vst.msk [vmem:[%s257 + $0x30] sm:$0xff] %vm377, %v1305
      %1334 = vst.msk [vmem:[%s257 + $0x38] sm:$0xff] %vm377, %v1306
      %1335 = vst.msk [vmem:[%s257 + $0x40] sm:$0xff] %vm377, %v1307
      %1336 = vst.msk [vmem:[%s257 + $0x48] sm:$0xff] %vm377, %v1308
      %1337 = vst.msk [vmem:[%s257 + $0x50] sm:$0xff] %vm377, %v1309
      %1338 = vst.msk [vmem:[%s257 + $0x58] sm:$0xff] %vm377, %v1310
      %1339 = vst.msk [vmem:[%s257 + $0x60] sm:$0xff] %vm377, %v1311
      %1340 = vst.msk [vmem:[%s257 + $0x68] sm:$0xff] %vm377, %v1312
      %1341 = vst.msk [vmem:[%s257 + $0x70] sm:$0xff] %vm377, %v1313
      %1342 = vst.msk [vmem:[%s257 + $0x78] sm:$0xff] %vm377, %v1314
      %1343 = vst.msk [vmem:[%s257 + $0x80] sm:$0xff] %vm377, %v1315
      %1344 = vst.msk [vmem:[%s257 + $0x88] sm:$0xff] %vm377, %v1316
      %1345 = vst.msk [vmem:[%s257 + $0x90] sm:$0xff] %vm377, %v1317
      %1346 = vst.msk [vmem:[%s257 + $0x98] sm:$0xff] %vm377, %v1318
      %1347 = vst.msk [vmem:[%s257 + $0xa0] sm:$0xff] %vm377, %v1319
      %1348 = vst.msk [vmem:[%s257 + $0xa8] sm:$0xff] %vm377, %v1320
      %1349 = vst.msk [vmem:[%s257 + $0xb0] sm:$0xff] %vm377, %v1321
      %1350 = vst.msk [vmem:[%s257 + $0xb8] sm:$0xff] %vm377, %v1322
      %1351 = vst.msk [vmem:[%s257 + $0xc0] sm:$0xff] %vm377, %v1323
      %1352 = vst.msk [vmem:[%s257 + $0xc8] sm:$0xff] %vm377, %v1324
      %1353 = vst.msk [vmem:[%s257 + $0xd0] sm:$0xff] %vm377, %v1325
      %1354 = vst.msk [vmem:[%s257 + $0xd8] sm:$0xff] %vm377, %v1326
      %p1355 = scmp.lt.s32.totalorder %s15, 1
      %s1356 = scalar_select %p1355, %s15, 1
      %s1357 = smul.addr %s1356, 28
      %s1358 = smul.addr %s1357, 8
      %s1359 = scalar_lea.vmem %s4, %s1358
      // Predicated region
      $region37: #{sdpa_pallas.1} parent=35 // pred_check
        %p1360 = pneg %p137
      $region38: #{sdpa_pallas.1} parent=35 // pred_check_branch
        %1362 = sbr.rel (%p1360) target = $region40
      $region39: #{sdpa_pallas.1} parent=35 // pred_region
        _
      $region40: #{sdpa_pallas.1} parent=35 // pred_fallthru
        _
    $region36: #{sdpa_pallas.1} parent=5 // pred_fallthru
      _
    %p1363 = scmp.le.s32.totalorder 2, %s10
    // Predicated region
    $region41: #{sdpa_pallas.1} parent=5 // pred_check
      %p1364 = pneg %p1363
    $region42: #{sdpa_pallas.1} parent=5 // pred_check_branch
      %1366 = sbr.rel (%p1364) target = $region44
    $region43: #{sdpa_pallas.1} parent=5 // pred_region
      %s1367 = ssub.s32 %s10, 2
      // Predicated region
      $region45: #{sdpa_pallas.1} parent=43 // pred_check
        %p1368 = pneg %p143
      $region46: #{sdpa_pallas.1} parent=43 // pred_check_branch
        %1370 = sbr.rel (%p1368) target = $region48
      $region47: #{sdpa_pallas.1} parent=43 // pred_region
        %p1371 = scmp.lt.s32.totalorder %s16, 1
        %s1372 = scalar_select %p1371, %s16, 1
        %s1373 = smul.addr %s1372, 28
        %s1374 = smul.addr %s1373, 8
        %s1375 = scalar_lea.vmem %s4, %s1374
      $region48: #{sdpa_pallas.1} parent=43 // pred_fallthru
        _
    $region44: #{sdpa_pallas.1} parent=5 // pred_fallthru
      _
  $region6: #{sdpa_pallas.1} parent=0 // loop_footer
    %s14 = sadd.s32 1, %s10
  $region7: #{sdpa_pallas.1} parent=0 // loop_footer_branch
    %9 = sbr.rel target = $region3
  $region8: #{sdpa_pallas.1} parent=0 // loop_exit
    _

</llo_original>
